<compile_context>
chip_gen: v7x
topology: tpu7x:2x2x1
jax: 0.10.0
libtpu: 0.0.40
codegen_flags: <defaults>
</compile_context>

<pallas_src>
import functools
from typing import NamedTuple

import jax
import jax.numpy as jnp
from jax.experimental import pallas as pl
from jax.experimental.pallas import tpu as pltpu


def _round_up(n, m):
    return ((n + m - 1) // m) * m


# ----------------------------- kernels ---------------------------------------

def _dqn_kernel(x_ref, w1_ref, b1_ref, w2_ref, b2_ref, w3_ref, b3_ref, o_ref):
    xb = x_ref[...].astype(jnp.bfloat16)
    h1 = jnp.dot(xb, w1_ref[...], preferred_element_type=jnp.float32)
    h1 = jnp.maximum(h1 + b1_ref[...], 0.0).astype(jnp.bfloat16)
    h2 = jnp.dot(h1, w2_ref[...], preferred_element_type=jnp.float32)
    h2 = jnp.maximum(h2 + b2_ref[...], 0.0).astype(jnp.bfloat16)
    q = jnp.dot(h2, w3_ref[...], preferred_element_type=jnp.float32) + b3_ref[...]
    o_ref[...] = q.astype(o_ref.dtype)


def _dqn_dueling_kernel(x_ref, w1_ref, b1_ref, w2_ref, b2_ref, wh_ref, bh_ref,
                        o_ref):
    xb = x_ref[...].astype(jnp.bfloat16)
    h1 = jnp.dot(xb, w1_ref[...], preferred_element_type=jnp.float32)
    h1 = jnp.maximum(h1 + b1_ref[...], 0.0).astype(jnp.bfloat16)
    h2 = jnp.dot(h1, w2_ref[...], preferred_element_type=jnp.float32)
    h2 = jnp.maximum(h2 + b2_ref[...], 0.0).astype(jnp.bfloat16)
    # Fused head columns: [0:A) advantage, col -2 = mean(advantage) (baked into
    # the packed weights as wa.mean(axis=1)), col -1 = value.  Everything after
    # the matmul is purely elementwise; padded columns are sliced off outside.
    va = jnp.dot(h2, wh_ref[...], preferred_element_type=jnp.float32) + bh_ref[...]
    v = va[:, -1:]
    a_mean = va[:, -2:-1]
    o_ref[...] = (va + (v - a_mean)).astype(o_ref.dtype)


# ----------------------------- one-time param packing ------------------------

class DQNMeta(NamedTuple):
    input_size: int
    hidden_size: int
    num_actions: int
    dueling: bool
    d_pad: int
    h_pad: int
    a_pad: int


def pack_dqn_params(params, input_size, num_actions, dueling=False):
    """Pad lane dims to multiples of 128, cast matmul weights to bf16 and fuse
    the dueling value/advantage/mean head.  Call ONCE when weights change, not
    per forward (keeps per-step HBM traffic to x + output only)."""
    hidden_size = params["w1"].shape[1]
    d_pad = _round_up(input_size, 128)
    h_pad = _round_up(hidden_size, 128)
    a_pad = _round_up(num_actions + (2 if dueling else 0), 128)

    def pad2(a, r, c):
        return jnp.pad(a, ((0, r - a.shape[0]), (0, c - a.shape[1])))

    packed = {
        "w1": pad2(params["w1"], d_pad, h_pad).astype(jnp.bfloat16),
        "b1": pad2(params["b1"], 1, h_pad).astype(jnp.float32),
        "w2": pad2(params["w2"], h_pad, h_pad).astype(jnp.bfloat16),
        "b2": pad2(params["b2"], 1, h_pad).astype(jnp.float32),
    }
    if not dueling:
        packed["w3"] = pad2(params["w3"], h_pad, a_pad).astype(jnp.bfloat16)
        packed["b3"] = pad2(params["b3"], 1, a_pad).astype(jnp.float32)
    else:
        A, Hs = num_actions, hidden_size
        # Fused head: advantage in cols [0:A), advantage-MEAN column at a_pad-2
        # (mean(h@wa + ba) == h@mean(wa) + mean(ba), linearity), value at a_pad-1.
        wh = jnp.zeros((h_pad, a_pad), jnp.float32)
        wh = wh.at[:Hs, :A].set(params["wa"])
        wh = wh.at[:Hs, a_pad - 2].set(params["wa"].mean(axis=1))
        wh = wh.at[:Hs, a_pad - 1].set(params["wv"][:, 0])
        bh = jnp.zeros((1, a_pad), jnp.float32)
        bh = bh.at[0, :A].set(params["ba"][0])
        bh = bh.at[0, a_pad - 2].set(params["ba"].mean())
        bh = bh.at[0, a_pad - 1].set(params["bv"][0, 0])
        packed["w3"] = wh.astype(jnp.bfloat16)
        packed["b3"] = bh

    meta = DQNMeta(int(input_size), int(hidden_size), int(num_actions),
                   bool(dueling), d_pad, h_pad, a_pad)
    return packed, meta


# ----------------------------- forward ----------------------------------------

def _weight_bytes(meta):
    return ((meta.d_pad * meta.h_pad + meta.h_pad * meta.h_pad
             + meta.h_pad * meta.a_pad) * 2           # bf16 weights
            + (2 * meta.h_pad + meta.a_pad) * 4)      # f32 biases


@functools.partial(jax.jit, static_argnames=("meta",))
def dqn_forward(x, packed, meta):
    """x: [B, C, H, W] or [B, D]. Returns Q-values [B, num_actions] (f32)."""
    B = x.shape[0]
    x2d = x.reshape(B, -1)
    D = x2d.shape[1]
    assert D == meta.input_size

    # Lane-pad x only when needed; otherwise pass it straight through (kernel
    # casts to bf16 on the fly) -> no extra HBM round trip for the activations.
    if D == meta.d_pad:
        x_in = x2d
    else:
        x_in = jnp.pad(x2d.astype(jnp.bfloat16), ((0, 0), (0, meta.d_pad - D)))

    x_row_bytes = meta.d_pad * x_in.dtype.itemsize
    out_row_bytes = meta.a_pad * 2                       # bf16 output
    w_bytes = _weight_bytes(meta)
    # Resident weights/biases (constant index_map): double-buffering them is
    # pure VMEM waste once they are big; tiny nets keep the default.
    single_buffer_weights = w_bytes > (1 << 20)
    w_resident = w_bytes * (1 if single_buffer_weights else 2)

    def vmem_need(tile_b):
        # x tile and out tile are double-buffered by the pipeline.
        return w_resident + 2 * tile_b * (x_row_bytes + out_row_bytes)

    # Batch tile: aim for >=2 grid steps (so ("parallel",) uses both v7x
    # TensorCores), multiple of 16 sublanes, within a conservative 48 MiB
    # working set (fits v7x's 64 MiB VMEM/TC), never larger than the batch.
    budget = 48 << 20
    tile_b = min(512, _round_up(max(1, (B + 1) // 2), 16))
    while tile_b > 16 and vmem_need(tile_b) > budget:
        tile_b //= 2
    tile_b = min(tile_b, B)
    # TODO(synk): if the weights alone exceed the budget (very wide input_size
    # on v7x), add a K-reduction grid axis for fc1 (tile x/(w1 rows), f32
    # accumulator scratch) instead of keeping all of w1 resident; optionally
    # store resident weights in fp8 on v7x.

    num_tiles = pl.cdiv(B, tile_b)
    vmem_limit = int(min(max(vmem_need(tile_b) * 1.25, 32 << 20), 100 << 20))

    def resident(shape):
        if single_buffer_weights:
            return pl.BlockSpec(shape, lambda i: (0, 0),
                                pipeline_mode=pl.Buffered(buffer_count=1))
        return pl.BlockSpec(shape, lambda i: (0, 0))

    kernel = _dqn_dueling_kernel if meta.dueling else _dqn_kernel

    out = pl.pallas_call(
        kernel,
        out_shape=jax.ShapeDtypeStruct((B, meta.a_pad), jnp.bfloat16),
        grid=(num_tiles,),
        in_specs=[
            pl.BlockSpec((tile_b, meta.d_pad), lambda i: (i, 0)),   # x (batch-tiled)
            resident((meta.d_pad, meta.h_pad)),                     # w1 (resident)
            resident((1, meta.h_pad)),                              # b1
            resident((meta.h_pad, meta.h_pad)),                     # w2
            resident((1, meta.h_pad)),                              # b2
            resident((meta.h_pad, meta.a_pad)),                     # w3 / fused head
            resident((1, meta.a_pad)),                              # b3 / fused bias
        ],
        out_specs=pl.BlockSpec((tile_b, meta.a_pad), lambda i: (i, 0)),
        compiler_params=pltpu.CompilerParams(
            dimension_semantics=("parallel",),
            vmem_limit_bytes=vmem_limit,
        ),
    )(x_in, packed["w1"], packed["b1"], packed["w2"], packed["b2"],
      packed["w3"], packed["b3"])

    # Slice away lane padding; cast the tiny real output back to f32.
    return out[:, :meta.num_actions].astype(jnp.float32)


# ----------------------------- param init ------------------------------------

def init_params(key, input_size, hidden_size, num_actions, dueling=False):
    """Deterministic synthetic weights, stored as [in, out] (x @ W + b)."""
    keys = jax.random.split(key, 10)

    def lin(kw, kb, fan_in, fan_out):
        bound = 1.0 / jnp.sqrt(jnp.float32(fan_in))
        w = jax.random.uniform(kw, (fan_in, fan_out), jnp.float32, -bound, bound)
        b = jax.random.uniform(kb, (1, fan_out), jnp.float32, -bound, bound)
        return w, b

    p = {}
    p["w1"], p["b1"] = lin(keys[0], keys[1], input_size, hidden_size)
    p["w2"], p["b2"] = lin(keys[2], keys[3], hidden_size, hidden_size)
    if dueling:
        p["wv"], p["bv"] = lin(keys[4], keys[5], hidden_size, 1)
        p["wa"], p["ba"] = lin(keys[6], keys[7], hidden_size, num_actions)
    else:
        p["w3"], p["b3"] = lin(keys[8], keys[9], hidden_size, num_actions)
    return p


# ----------------------------- reference (pure JAX, f32) ----------------------

def dqn_reference(x, params, *, dueling=False):
    x2d = x.reshape(x.shape[0], -1).astype(jnp.float32)
    h1 = jnp.maximum(x2d @ params["w1"] + params["b1"], 0.0)
    h2 = jnp.maximum(h1 @ params["w2"] + params["b2"], 0.0)
    if not dueling:
        return h2 @ params["w3"] + params["b3"]
    v = h2 @ params["wv"] + params["bv"]
    a = h2 @ params["wa"] + params["ba"]
    return a + (v - jnp.mean(a, axis=-1, keepdims=True))


# ----------------------------- main -------------------------------------------

if __name__ == "__main__":
    key = jax.random.PRNGKey(0)
    k_x1, k_x2, k_p1, k_p2 = jax.random.split(key, 4)

    hidden_size = 32
    num_actions = 4
    # Loose tolerance: matmul operands and the stored output are bf16
    # (accumulation is f32).
    ATOL = RTOL = 5e-2

    # ---- plain head: input_size = 64 (exercises the lane-pad path) ----------
    B, C, H, W = 2, 4, 4, 4
    input_size = C * H * W
    x = jax.random.normal(k_x1, (B, C, H, W), jnp.float32)
    params = init_params(k_p1, input_size, hidden_size, num_actions, dueling=False)
    packed, meta = pack_dqn_params(params, input_size, num_actions, dueling=False)
    q = jax.block_until_ready(dqn_forward(x, packed, meta))
    q_ref = dqn_reference(x, params, dueling=False)
    assert q.shape == (B, num_actions)
    assert jnp.allclose(q, q_ref, atol=ATOL, rtol=RTOL), (q, q_ref)

    # ---- dueling head: input_size = 256 (128-aligned, no-copy x path) -------
    B2, C2, H2, W2 = 2, 4, 8, 8
    input_size2 = C2 * H2 * W2
    x2 = jax.random.normal(k_x2, (B2, C2, H2, W2), jnp.float32)
    params_d = init_params(k_p2, input_size2, hidden_size, num_actions, dueling=True)
    packed_d, meta_d = pack_dqn_params(params_d, input_size2, num_actions,
                                       dueling=True)
    qd = jax.block_until_ready(dqn_forward(x2, packed_d, meta_d))
    qd_ref = dqn_reference(x2, params_d, dueling=True)
    assert qd.shape == (B2, num_actions)
    assert jnp.allclose(qd, qd_ref, atol=ATOL, rtol=RTOL), (qd, qd_ref)

    print("KERNEL_OK")
</pallas_src>

<mosaic_0001>
module attributes {stable_mosaic.version = 11 : i64} {
  func.func @_dqn_kernel(%arg0: i32, %arg1: memref<2x128xbf16, #tpu.memory_space<vmem>>, %arg2: memref<128x128xbf16, #tpu.memory_space<vmem>>, %arg3: memref<1x128xf32, #tpu.memory_space<vmem>>, %arg4: memref<128x128xbf16, #tpu.memory_space<vmem>>, %arg5: memref<1x128xf32, #tpu.memory_space<vmem>>, %arg6: memref<128x128xbf16, #tpu.memory_space<vmem>>, %arg7: memref<1x128xf32, #tpu.memory_space<vmem>>, %arg8: memref<2x128xbf16, #tpu.memory_space<vmem>>) attributes {dimension_semantics = [#tpu.dimension_semantics<parallel>], iteration_bounds = array<i64: 1>, scalar_prefetch = 0 : i64, scratch_operands = 0 : i64, tpu.core_type = #tpu.core_type<tc>, window_params = [{transform_indices = @transform_0, window_bounds = array<i64: 2, 128>}, {pipeline_mode = #tpu.pipeline_mode<synchronous>, transform_indices = @transform_1, window_bounds = array<i64: 128, 128>}, {pipeline_mode = #tpu.pipeline_mode<synchronous>, transform_indices = @transform_2, window_bounds = array<i64: 1, 128>}, {pipeline_mode = #tpu.pipeline_mode<synchronous>, transform_indices = @transform_3, window_bounds = array<i64: 128, 128>}, {pipeline_mode = #tpu.pipeline_mode<synchronous>, transform_indices = @transform_4, window_bounds = array<i64: 1, 128>}, {pipeline_mode = #tpu.pipeline_mode<synchronous>, transform_indices = @transform_5, window_bounds = array<i64: 128, 128>}, {pipeline_mode = #tpu.pipeline_mode<synchronous>, transform_indices = @transform_6, window_bounds = array<i64: 1, 128>}, {transform_indices = @transform_7, window_bounds = array<i64: 2, 128>}]} {
    %c0 = arith.constant 0 : index
    %c0_0 = arith.constant 0 : index
    %0 = vector.load %arg1[%c0, %c0_0] : memref<2x128xbf16, #tpu.memory_space<vmem>>, vector<2x128xbf16>
    %c0_1 = arith.constant 0 : index
    %c0_2 = arith.constant 0 : index
    %1 = vector.load %arg2[%c0_1, %c0_2] : memref<128x128xbf16, #tpu.memory_space<vmem>>, vector<128x128xbf16>
    %cst = arith.constant dense<0.000000e+00> : vector<2x128xf32>
    %2 = tpu.matmul %0, %1, %cst {dimension_numbers = #tpu.dot_dimension_numbers<[1], [0], [0], [1], [0, 0, 1, 1], [], []>} : vector<2x128xbf16>, vector<128x128xbf16>, vector<2x128xf32> -> vector<2x128xf32>
    %c0_3 = arith.constant 0 : index
    %c0_4 = arith.constant 0 : index
    %3 = vector.load %arg3[%c0_3, %c0_4] : memref<1x128xf32, #tpu.memory_space<vmem>>, vector<1x128xf32>
    %4 = vector.broadcast %3 : vector<1x128xf32> to vector<2x128xf32>
    %5 = arith.addf %2, %4 : vector<2x128xf32>
    %cst_5 = arith.constant 0.000000e+00 : f32
    %6 = vector.broadcast %cst_5 : f32 to vector<2x128xf32>
    %7 = arith.maximumf %5, %6 : vector<2x128xf32>
    %8 = arith.truncf %7 : vector<2x128xf32> to vector<2x128xbf16>
    %c0_6 = arith.constant 0 : index
    %c0_7 = arith.constant 0 : index
    %9 = vector.load %arg4[%c0_6, %c0_7] : memref<128x128xbf16, #tpu.memory_space<vmem>>, vector<128x128xbf16>
    %cst_8 = arith.constant dense<0.000000e+00> : vector<2x128xf32>
    %10 = tpu.matmul %8, %9, %cst_8 {dimension_numbers = #tpu.dot_dimension_numbers<[1], [0], [0], [1], [0, 0, 1, 1], [], []>} : vector<2x128xbf16>, vector<128x128xbf16>, vector<2x128xf32> -> vector<2x128xf32>
    %c0_9 = arith.constant 0 : index
    %c0_10 = arith.constant 0 : index
    %11 = vector.load %arg5[%c0_9, %c0_10] : memref<1x128xf32, #tpu.memory_space<vmem>>, vector<1x128xf32>
    %12 = vector.broadcast %11 : vector<1x128xf32> to vector<2x128xf32>
    %13 = arith.addf %10, %12 : vector<2x128xf32>
    %cst_11 = arith.constant 0.000000e+00 : f32
    %14 = vector.broadcast %cst_11 : f32 to vector<2x128xf32>
    %15 = arith.maximumf %13, %14 : vector<2x128xf32>
    %16 = arith.truncf %15 : vector<2x128xf32> to vector<2x128xbf16>
    %c0_12 = arith.constant 0 : index
    %c0_13 = arith.constant 0 : index
    %17 = vector.load %arg6[%c0_12, %c0_13] : memref<128x128xbf16, #tpu.memory_space<vmem>>, vector<128x128xbf16>
    %cst_14 = arith.constant dense<0.000000e+00> : vector<2x128xf32>
    %18 = tpu.matmul %16, %17, %cst_14 {dimension_numbers = #tpu.dot_dimension_numbers<[1], [0], [0], [1], [0, 0, 1, 1], [], []>} : vector<2x128xbf16>, vector<128x128xbf16>, vector<2x128xf32> -> vector<2x128xf32>
    %c0_15 = arith.constant 0 : index
    %c0_16 = arith.constant 0 : index
    %19 = vector.load %arg7[%c0_15, %c0_16] : memref<1x128xf32, #tpu.memory_space<vmem>>, vector<1x128xf32>
    %20 = vector.broadcast %19 : vector<1x128xf32> to vector<2x128xf32>
    %21 = arith.addf %18, %20 : vector<2x128xf32>
    %22 = arith.truncf %21 : vector<2x128xf32> to vector<2x128xbf16>
    %c0_17 = arith.constant 0 : index
    %c0_18 = arith.constant 0 : index
    %23 = vector.load %arg8[%c0_17, %c0_18] : memref<2x128xbf16, #tpu.memory_space<vmem>>, vector<2x128xbf16>
    tpu.vector_store %arg8[%c0_17, %c0_18], %22 {strides = array<i32>} : memref<2x128xbf16, #tpu.memory_space<vmem>>, vector<2x128xbf16>,
    return
  }
  func.func @transform_0(%arg0: i32) -> (i32, i32) {
    %c0_i32 = arith.constant 0 : i32
    %c0_i32_0 = arith.constant 0 : i32
    return %arg0, %c0_i32 : i32, i32
  }
  func.func @transform_1(%arg0: i32) -> (i32, i32) {
    %c0_i32 = arith.constant 0 : i32
    %c0_i32_0 = arith.constant 0 : i32
    %c0_i32_1 = arith.constant 0 : i32
    return %c0_i32, %c0_i32_0 : i32, i32
  }
  func.func @transform_2(%arg0: i32) -> (i32, i32) {
    %c0_i32 = arith.constant 0 : i32
    %c0_i32_0 = arith.constant 0 : i32
    %c0_i32_1 = arith.constant 0 : i32
    return %c0_i32, %c0_i32_0 : i32, i32
  }
  func.func @transform_3(%arg0: i32) -> (i32, i32) {
    %c0_i32 = arith.constant 0 : i32
    %c0_i32_0 = arith.constant 0 : i32
    %c0_i32_1 = arith.constant 0 : i32
    return %c0_i32, %c0_i32_0 : i32, i32
  }
  func.func @transform_4(%arg0: i32) -> (i32, i32) {
    %c0_i32 = arith.constant 0 : i32
    %c0_i32_0 = arith.constant 0 : i32
    %c0_i32_1 = arith.constant 0 : i32
    return %c0_i32, %c0_i32_0 : i32, i32
  }
  func.func @transform_5(%arg0: i32) -> (i32, i32) {
    %c0_i32 = arith.constant 0 : i32
    %c0_i32_0 = arith.constant 0 : i32
    %c0_i32_1 = arith.constant 0 : i32
    return %c0_i32, %c0_i32_0 : i32, i32
  }
  func.func @transform_6(%arg0: i32) -> (i32, i32) {
    %c0_i32 = arith.constant 0 : i32
    %c0_i32_0 = arith.constant 0 : i32
    %c0_i32_1 = arith.constant 0 : i32
    return %c0_i32, %c0_i32_0 : i32, i32
  }
  func.func @transform_7(%arg0: i32) -> (i32, i32) {
    %c0_i32 = arith.constant 0 : i32
    %c0_i32_0 = arith.constant 0 : i32
    return %arg0, %c0_i32 : i32, i32
  }
}

</mosaic_0001>

<llo_original>
// kernel: dqn_forward.1
$region0: #{dqn_forward.1}
  #allocation0 [shape = 'u32[]', space=smem, size = 0x4, offset = 0x4, fixed_abs, tag = 'smem constant byte address 0x4 - core index']
  #allocation1 [shape = 'u32[144,128]{1,0:T(1,128)}', space=vmem, size = 0x12000, scoped, tag = 'internal scratch']
  %s0 = inlined_call_operand.vmem [shape: bf16[2,128], index: 0, kind: input, shape index: {}]
  %s1 = inlined_call_operand.vmem [shape: bf16[128,128], index: 1, kind: input, shape index: {}]
  %s2 = inlined_call_operand.vmem [shape: f32[1,128], index: 2, kind: input, shape index: {}]
  %s3 = inlined_call_operand.hbm [shape: bf16[128,128], index: 3, kind: input, shape index: {}]
  %s4 = inlined_call_operand.vmem [shape: f32[1,128], index: 4, kind: input, shape index: {}]
  %s5 = inlined_call_operand.hbm [shape: bf16[128,128], index: 5, kind: input, shape index: {}]
  %s6 = inlined_call_operand.vmem [shape: f32[1,128], index: 6, kind: input, shape index: {}]
  %s7 = inlined_call_operand.vmem [shape: bf16[2,128], index: 7, kind: output, shape index: {}]
  %s8 = sld [smem:[#allocation0]]
  $region46: #{dqn_forward.1} parent=0
    _
  %s10 = ssub.s32 1, %s8
  %s11 = scalar_select 0, %s10, %s8
  $region1: #{dqn_forward.1} parent=0
    #allocation2 [shape = 'u8[32768]{0}', space=vmem, size = 0x8000, scoped, tag = 'input window, operand 3, single buffered']
    #allocation3 [shape = 's32[1]{0}', space=sflag, size = 0x4, scoped, tag = 'scoped memory for dqn_forward.1']
    #allocation4 [shape = 'u8[32768]{0}', space=vmem, size = 0x8000, scoped, tag = 'input window, operand 5, single buffered']
    #allocation5 [shape = 's32[1]{0}', space=sflag, size = 0x4, scoped, tag = 'scoped memory for dqn_forward.1']
    %12 = vsyncpa [#allocation3], 0
    %13 = vsyncpa [#allocation5], 0
    // Predicated region
    $region2: #{dqn_forward.1} parent=1 // pred_check
      _
    $region3: #{dqn_forward.1} parent=1 // pred_check_branch
      %15 = sbr.rel (0) target = $region5
    $region4: #{dqn_forward.1} parent=1 // pred_region
      _
    $region5: #{dqn_forward.1} parent=1 // pred_fallthru
      _
    // Predicated region
    $region6: #{dqn_forward.1} parent=1 // pred_check
      _
    $region7: #{dqn_forward.1} parent=1 // pred_check_branch
      %17 = sbr.rel (0) target = $region9
    $region8: #{dqn_forward.1} parent=1 // pred_region
      _
    $region9: #{dqn_forward.1} parent=1 // pred_fallthru
      _
    // Predicated region
    $region10: #{dqn_forward.1} parent=1 // pred_check
      _
    $region11: #{dqn_forward.1} parent=1 // pred_check_branch
      %19 = sbr.rel (0) target = $region13
    $region12: #{dqn_forward.1} parent=1 // pred_region
      _
    $region13: #{dqn_forward.1} parent=1 // pred_fallthru
      _
    // Predicated region
    $region14: #{dqn_forward.1} parent=1 // pred_check
      _
    $region15: #{dqn_forward.1} parent=1 // pred_check_branch
      %21 = sbr.rel (0) target = $region17
    $region16: #{dqn_forward.1} parent=1 // pred_region
      %s23 = ssub.s32 1024, 1024
      %24 = vsyncadd [#allocation3], %s23
      %s25 = sshll.u32 [#allocation2], 4
      %s26 = int_to_ptr.vmem [resolvable:$true] %s25
      %31 = dma.hbm_to_vmem [thread:$0]  %s3, 1024, %s26, [#allocation3], 64, 64, 4
    $region17: #{dqn_forward.1} parent=1 // pred_fallthru
      _
    // Predicated region
    $region18: #{dqn_forward.1} parent=1 // pred_check
      _
    $region19: #{dqn_forward.1} parent=1 // pred_check_branch
      %33 = sbr.rel (0) target = $region21
    $region20: #{dqn_forward.1} parent=1 // pred_region
      _
    $region21: #{dqn_forward.1} parent=1 // pred_fallthru
      _
    // Predicated region
    $region22: #{dqn_forward.1} parent=1 // pred_check
      _
    $region23: #{dqn_forward.1} parent=1 // pred_check_branch
      %35 = sbr.rel (0) target = $region25
    $region24: #{dqn_forward.1} parent=1 // pred_region
      %s37 = ssub.s32 1024, 1024
      %38 = vsyncadd [#allocation5], %s37
      %s39 = sshll.u32 [#allocation4], 4
      %s40 = int_to_ptr.vmem [resolvable:$true] %s39
      %45 = dma.hbm_to_vmem [thread:$0]  %s5, 1024, %s40, [#allocation5], 64, 64, 4
    $region25: #{dqn_forward.1} parent=1 // pred_fallthru
      _
    // Predicated region
    $region26: #{dqn_forward.1} parent=1 // pred_check
      _
    $region27: #{dqn_forward.1} parent=1 // pred_check_branch
      %47 = sbr.rel (0) target = $region29
    $region28: #{dqn_forward.1} parent=1 // pred_region
      _
    $region29: #{dqn_forward.1} parent=1 // pred_fallthru
      _
    // Predicated region
    $region30: #{dqn_forward.1} parent=1 // pred_check
      _
    $region31: #{dqn_forward.1} parent=1 // pred_check_branch
      %49 = sbr.rel (0) target = $region33
    $region32: #{dqn_forward.1} parent=1 // pred_region
      %50 = dma.done [#allocation3], 1024
    $region33: #{dqn_forward.1} parent=1 // pred_fallthru
      _
    // Predicated region
    $region34: #{dqn_forward.1} parent=1 // pred_check
      _
    $region35: #{dqn_forward.1} parent=1 // pred_check_branch
      %52 = sbr.rel (0) target = $region37
    $region36: #{dqn_forward.1} parent=1 // pred_region
      %53 = dma.done [#allocation5], 1024
    $region37: #{dqn_forward.1} parent=1 // pred_fallthru
      _
    %v55 = vld [vmem:[%s0] sm:$0x1]
    %v56 = vld [vmem:[%s1] sm:$0xf]
    %v57 = vld [vmem:[%s1 + $0x4] sm:$0xf]
    %v58 = vld [vmem:[%s1 + $0x8] sm:$0xf]
    %v59 = vld [vmem:[%s1 + $0xc] sm:$0xf]
    %v60 = vld [vmem:[%s1 + $0x10] sm:$0xf]
    %v61 = vld [vmem:[%s1 + $0x14] sm:$0xf]
    %v62 = vld [vmem:[%s1 + $0x18] sm:$0xf]
    %v63 = vld [vmem:[%s1 + $0x1c] sm:$0xf]
    %v64 = vld [vmem:[%s1 + $0x20] sm:$0xf]
    %v65 = vld [vmem:[%s1 + $0x24] sm:$0xf]
    %v66 = vld [vmem:[%s1 + $0x28] sm:$0xf]
    %v67 = vld [vmem:[%s1 + $0x2c] sm:$0xf]
    %v68 = vld [vmem:[%s1 + $0x30] sm:$0xf]
    %v69 = vld [vmem:[%s1 + $0x34] sm:$0xf]
    %v70 = vld [vmem:[%s1 + $0x38] sm:$0xf]
    %v71 = vld [vmem:[%s1 + $0x3c] sm:$0xf]
    %v72 = vld [vmem:[%s2] sm:$0x1]
    %v74 = vlaneseq
    %v75 = vshrl.u32 %v74, 7
    %v76 = vsub.s32 0, %v75
    %v77 = vrot.slane %v72, %v76
    %v95 = vunpack.c.l.b16 %v56
    %v96 = vunpack.c.l.b16 %v57
    %v97 = vunpack.c.l.b16 %v58
    %v98 = vunpack.c.l.b16 %v59
    %v99 = vunpack.c.l.b16 %v60
    %v100 = vunpack.c.l.b16 %v61
    %v101 = vunpack.c.l.b16 %v62
    %v102 = vunpack.c.l.b16 %v63
    %v103 = vunpack.c.l.b16 %v64
    %v104 = vunpack.c.l.b16 %v65
    %v105 = vunpack.c.l.b16 %v66
    %v106 = vunpack.c.l.b16 %v67
    %v107 = vunpack.c.l.b16 %v68
    %v108 = vunpack.c.l.b16 %v69
    %v109 = vunpack.c.l.b16 %v70
    %v110 = vunpack.c.l.b16 %v71
    %v111 = vpack.c.b16 %v96, %v95
    %v112 = vpack.c.b16 %v98, %v97
    %v113 = vpack.c.b16 %v100, %v99
    %v114 = vpack.c.b16 %v102, %v101
    %v115 = vpack.c.b16 %v104, %v103
    %v116 = vpack.c.b16 %v106, %v105
    %v117 = vpack.c.b16 %v108, %v107
    %v118 = vpack.c.b16 %v110, %v109
    %127 = vmatprep.subr.bf16.mxu0 0
    %128 = vmatpush1.bf16.msra.mxu0 %v111
    %129 = vmatprep.subr.bf16.mxu0 0
    %130 = vmatpush1.bf16.msra.mxu0 %v112
    %131 = vmatprep.subr.bf16.mxu0 0
    %132 = vmatpush1.bf16.msra.mxu0 %v113
    %133 = vmatprep.subr.bf16.mxu0 0
    %134 = vmatpush1.bf16.msra.mxu0 %v114
    %135 = vmatprep.subr.bf16.mxu0 0
    %136 = vmatpush1.bf16.msra.mxu0 %v115
    %137 = vmatprep.subr.bf16.mxu0 0
    %138 = vmatpush1.bf16.msra.mxu0 %v116
    %139 = vmatprep.subr.bf16.mxu0 0
    %140 = vmatpush1.bf16.msra.mxu0 %v117
    %141 = vmatprep.subr.bf16.mxu0 0
    %142 = vmatpush1.bf16.msra.mxu0 %v118
    %143 = vmatprep.subr.bf16.mxu0 0
    %144 = vmatpush1.bf16.msra.mxu0 0
    %145 = vmatprep.subr.bf16.mxu0 0
    %146 = vmatpush1.bf16.msra.mxu0 0
    %147 = vmatprep.subr.bf16.mxu0 0
    %148 = vmatpush1.bf16.msra.mxu0 0
    %149 = vmatprep.subr.bf16.mxu0 0
    %150 = vmatpush1.bf16.msra.mxu0 0
    %151 = vmatprep.subr.bf16.mxu0 0
    %152 = vmatpush1.bf16.msra.mxu0 0
    %153 = vmatprep.subr.bf16.mxu0 0
    %154 = vmatpush1.bf16.msra.mxu0 0
    %155 = vmatprep.subr.bf16.mxu0 0
    %156 = vmatpush1.bf16.msra.mxu0 0
    %157 = vmatprep.subr.bf16.mxu0 0
    %158 = vmatpush1.bf16.msra.mxu0 0
    %159 = vmatprep.mubr.bf16.mxu0 0
    %160 = vmatmul.mubr.bf16.gmra.mrb[0].mxu0 %v55
    %v161 = vpop.f32.mrb[0].mxu0
    %v162 = vadd.f32 %v77, %v161
    %v163 = vpop.f32.mrb[0].mxu0
    %v164 = vpop.f32.mrb[0].mxu0
    %v165 = vpop.f32.mrb[0].mxu0
    %166 = vdwg.mxu0
    %v167 = vmax.f32 %v162, 0.0
    %v168 = vpack.c.bf16 %v167, %v167
    %v169 = vld [vmem:[#allocation2] sm:$0xf]
    %v170 = vld [vmem:[#allocation2 + $0x4] sm:$0xf]
    %v171 = vld [vmem:[#allocation2 + $0x8] sm:$0xf]
    %v172 = vld [vmem:[#allocation2 + $0xc] sm:$0xf]
    %v173 = vld [vmem:[#allocation2 + $0x10] sm:$0xf]
    %v174 = vld [vmem:[#allocation2 + $0x14] sm:$0xf]
    %v175 = vld [vmem:[#allocation2 + $0x18] sm:$0xf]
    %v176 = vld [vmem:[#allocation2 + $0x1c] sm:$0xf]
    %v177 = vld [vmem:[#allocation2 + $0x20] sm:$0xf]
    %v178 = vld [vmem:[#allocation2 + $0x24] sm:$0xf]
    %v179 = vld [vmem:[#allocation2 + $0x28] sm:$0xf]
    %v180 = vld [vmem:[#allocation2 + $0x2c] sm:$0xf]
    %v181 = vld [vmem:[#allocation2 + $0x30] sm:$0xf]
    %v182 = vld [vmem:[#allocation2 + $0x34] sm:$0xf]
    %v183 = vld [vmem:[#allocation2 + $0x38] sm:$0xf]
    %v184 = vld [vmem:[#allocation2 + $0x3c] sm:$0xf]
    %v185 = vld [vmem:[%s4] sm:$0x1]
    %v187 = vlaneseq
    %v188 = vshrl.u32 %v187, 7
    %v189 = vsub.s32 0, %v188
    %v190 = vrot.slane %v185, %v189
    %v208 = vunpack.c.l.b16 %v169
    %v209 = vunpack.c.l.b16 %v170
    %v210 = vunpack.c.l.b16 %v171
    %v211 = vunpack.c.l.b16 %v172
    %v212 = vunpack.c.l.b16 %v173
    %v213 = vunpack.c.l.b16 %v174
    %v214 = vunpack.c.l.b16 %v175
    %v215 = vunpack.c.l.b16 %v176
    %v216 = vunpack.c.l.b16 %v177
    %v217 = vunpack.c.l.b16 %v178
    %v218 = vunpack.c.l.b16 %v179
    %v219 = vunpack.c.l.b16 %v180
    %v220 = vunpack.c.l.b16 %v181
    %v221 = vunpack.c.l.b16 %v182
    %v222 = vunpack.c.l.b16 %v183
    %v223 = vunpack.c.l.b16 %v184
    %v224 = vpack.c.b16 %v209, %v208
    %v225 = vpack.c.b16 %v211, %v210
    %v226 = vpack.c.b16 %v213, %v212
    %v227 = vpack.c.b16 %v215, %v214
    %v228 = vpack.c.b16 %v217, %v216
    %v229 = vpack.c.b16 %v219, %v218
    %v230 = vpack.c.b16 %v221, %v220
    %v231 = vpack.c.b16 %v223, %v222
    %240 = vmatprep.subr.bf16.mxu0 0
    %241 = vmatpush1.bf16.msra.mxu0 %v224
    %242 = vmatprep.subr.bf16.mxu0 0
    %243 = vmatpush1.bf16.msra.mxu0 %v225
    %244 = vmatprep.subr.bf16.mxu0 0
    %245 = vmatpush1.bf16.msra.mxu0 %v226
    %246 = vmatprep.subr.bf16.mxu0 0
    %247 = vmatpush1.bf16.msra.mxu0 %v227
    %248 = vmatprep.subr.bf16.mxu0 0
    %249 = vmatpush1.bf16.msra.mxu0 %v228
    %250 = vmatprep.subr.bf16.mxu0 0
    %251 = vmatpush1.bf16.msra.mxu0 %v229
    %252 = vmatprep.subr.bf16.mxu0 0
    %253 = vmatpush1.bf16.msra.mxu0 %v230
    %254 = vmatprep.subr.bf16.mxu0 0
    %255 = vmatpush1.bf16.msra.mxu0 %v231
    %256 = vmatprep.subr.bf16.mxu0 0
    %257 = vmatpush1.bf16.msra.mxu0 0
    %258 = vmatprep.subr.bf16.mxu0 0
    %259 = vmatpush1.bf16.msra.mxu0 0
    %260 = vmatprep.subr.bf16.mxu0 0
    %261 = vmatpush1.bf16.msra.mxu0 0
    %262 = vmatprep.subr.bf16.mxu0 0
    %263 = vmatpush1.bf16.msra.mxu0 0
    %264 = vmatprep.subr.bf16.mxu0 0
    %265 = vmatpush1.bf16.msra.mxu0 0
    %266 = vmatprep.subr.bf16.mxu0 0
    %267 = vmatpush1.bf16.msra.mxu0 0
    %268 = vmatprep.subr.bf16.mxu0 0
    %269 = vmatpush1.bf16.msra.mxu0 0
    %270 = vmatprep.subr.bf16.mxu0 0
    %271 = vmatpush1.bf16.msra.mxu0 0
    %272 = vmatprep.mubr.bf16.mxu0 0
    %273 = vmatmul.mubr.bf16.gmra.mrb[0].mxu0 %v168
    %v274 = vpop.f32.mrb[0].mxu0
    %v275 = vadd.f32 %v190, %v274
    %v276 = vpop.f32.mrb[0].mxu0
    %v277 = vpop.f32.mrb[0].mxu0
    %v278 = vpop.f32.mrb[0].mxu0
    %279 = vdwg.mxu0
    %v280 = vmax.f32 %v275, 0.0
    %v281 = vpack.c.bf16 %v280, %v280
    %v282 = vld [vmem:[#allocation4] sm:$0xf]
    %v283 = vld [vmem:[#allocation4 + $0x4] sm:$0xf]
    %v284 = vld [vmem:[#allocation4 + $0x8] sm:$0xf]
    %v285 = vld [vmem:[#allocation4 + $0xc] sm:$0xf]
    %v286 = vld [vmem:[#allocation4 + $0x10] sm:$0xf]
    %v287 = vld [vmem:[#allocation4 + $0x14] sm:$0xf]
    %v288 = vld [vmem:[#allocation4 + $0x18] sm:$0xf]
    %v289 = vld [vmem:[#allocation4 + $0x1c] sm:$0xf]
    %v290 = vld [vmem:[#allocation4 + $0x20] sm:$0xf]
    %v291 = vld [vmem:[#allocation4 + $0x24] sm:$0xf]
    %v292 = vld [vmem:[#allocation4 + $0x28] sm:$0xf]
    %v293 = vld [vmem:[#allocation4 + $0x2c] sm:$0xf]
    %v294 = vld [vmem:[#allocation4 + $0x30] sm:$0xf]
    %v295 = vld [vmem:[#allocation4 + $0x34] sm:$0xf]
    %v296 = vld [vmem:[#allocation4 + $0x38] sm:$0xf]
    %v297 = vld [vmem:[#allocation4 + $0x3c] sm:$0xf]
    %v298 = vld [vmem:[%s6] sm:$0x1]
    %v300 = vlaneseq
    %v301 = vshrl.u32 %v300, 7
    %v302 = vsub.s32 0, %v301
    %v303 = vrot.slane %v298, %v302
    %v321 = vunpack.c.l.b16 %v282
    %v322 = vunpack.c.l.b16 %v283
    %v323 = vunpack.c.l.b16 %v284
    %v324 = vunpack.c.l.b16 %v285
    %v325 = vunpack.c.l.b16 %v286
    %v326 = vunpack.c.l.b16 %v287
    %v327 = vunpack.c.l.b16 %v288
    %v328 = vunpack.c.l.b16 %v289
    %v329 = vunpack.c.l.b16 %v290
    %v330 = vunpack.c.l.b16 %v291
    %v331 = vunpack.c.l.b16 %v292
    %v332 = vunpack.c.l.b16 %v293
    %v333 = vunpack.c.l.b16 %v294
    %v334 = vunpack.c.l.b16 %v295
    %v335 = vunpack.c.l.b16 %v296
    %v336 = vunpack.c.l.b16 %v297
    %v337 = vpack.c.b16 %v322, %v321
    %v338 = vpack.c.b16 %v324, %v323
    %v339 = vpack.c.b16 %v326, %v325
    %v340 = vpack.c.b16 %v328, %v327
    %v341 = vpack.c.b16 %v330, %v329
    %v342 = vpack.c.b16 %v332, %v331
    %v343 = vpack.c.b16 %v334, %v333
    %v344 = vpack.c.b16 %v336, %v335
    %353 = vmatprep.subr.bf16.mxu0 0
    %354 = vmatpush1.bf16.msra.mxu0 %v337
    %355 = vmatprep.subr.bf16.mxu0 0
    %356 = vmatpush1.bf16.msra.mxu0 %v338
    %357 = vmatprep.subr.bf16.mxu0 0
    %358 = vmatpush1.bf16.msra.mxu0 %v339
    %359 = vmatprep.subr.bf16.mxu0 0
    %360 = vmatpush1.bf16.msra.mxu0 %v340
    %361 = vmatprep.subr.bf16.mxu0 0
    %362 = vmatpush1.bf16.msra.mxu0 %v341
    %363 = vmatprep.subr.bf16.mxu0 0
    %364 = vmatpush1.bf16.msra.mxu0 %v342
    %365 = vmatprep.subr.bf16.mxu0 0
    %366 = vmatpush1.bf16.msra.mxu0 %v343
    %367 = vmatprep.subr.bf16.mxu0 0
    %368 = vmatpush1.bf16.msra.mxu0 %v344
    %369 = vmatprep.subr.bf16.mxu0 0
    %370 = vmatpush1.bf16.msra.mxu0 0
    %371 = vmatprep.subr.bf16.mxu0 0
    %372 = vmatpush1.bf16.msra.mxu0 0
    %373 = vmatprep.subr.bf16.mxu0 0
    %374 = vmatpush1.bf16.msra.mxu0 0
    %375 = vmatprep.subr.bf16.mxu0 0
    %376 = vmatpush1.bf16.msra.mxu0 0
    %377 = vmatprep.subr.bf16.mxu0 0
    %378 = vmatpush1.bf16.msra.mxu0 0
    %379 = vmatprep.subr.bf16.mxu0 0
    %380 = vmatpush1.bf16.msra.mxu0 0
    %381 = vmatprep.subr.bf16.mxu0 0
    %382 = vmatpush1.bf16.msra.mxu0 0
    %383 = vmatprep.subr.bf16.mxu0 0
    %384 = vmatpush1.bf16.msra.mxu0 0
    %385 = vmatprep.mubr.bf16.mxu0 0
    %386 = vmatmul.mubr.bf16.gmra.mrb[0].mxu0 %v281
    %v387 = vpop.f32.mrb[0].mxu0
    %v388 = vadd.f32 %v303, %v387
    %v389 = vpop.f32.mrb[0].mxu0
    %v390 = vpop.f32.mrb[0].mxu0
    %v391 = vpop.f32.mrb[0].mxu0
    %392 = vdwg.mxu0
    %v393 = vpack.c.bf16 %v388, %v388
    %394 = vst [vmem:[%s7] sm:$0x1] %v393
    // Predicated region
    $region38: #{dqn_forward.1} parent=1 // pred_check
      _
    $region39: #{dqn_forward.1} parent=1 // pred_check_branch
      %396 = sbr.rel (0) target = $region41
    $region40: #{dqn_forward.1} parent=1 // pred_region
      _
    $region41: #{dqn_forward.1} parent=1 // pred_fallthru
      _
    // Predicated region
    $region42: #{dqn_forward.1} parent=1 // pred_check
      _
    $region43: #{dqn_forward.1} parent=1 // pred_check_branch
      %398 = sbr.rel (0) target = $region45
    $region44: #{dqn_forward.1} parent=1 // pred_region
      _
    $region45: #{dqn_forward.1} parent=1 // pred_fallthru
      _
    %399 = vsyncpa [#allocation3], 1
    %400 = vsyncpa [#allocation5], 1

</llo_original>
